<compile_context>
chip_gen: v6e
topology: v6e:2x2x1
jax: 0.10.0
libtpu: 0.0.40
codegen_flags: <defaults>
</compile_context>

<pallas_src>
import functools

import jax
import jax.numpy as jnp
from jax.experimental import pallas as pl
from jax.experimental.pallas import tpu as pltpu


def _conv_im2col_kernel(x_ref, w_ref, o_ref, patches_ref, *,
                        Cin, Cout, W, KH, KW, Mp_pad, K, K_pad, Nb):
    # x_ref:       (Nb, Cin, Wpad)        flattened spatial rows, pre-padded in the wrapper
    # w_ref:       (Cout_pad, K_pad)      columns ordered (kh, kw, cin); column K = bias
    # o_ref:       (Nb, Cout, Mp_pad)     lane-dense padded output slab per batch element
    # patches_ref: (K_pad, Nb*Mp_pad)     VMEM scratch holding the transposed im2col matrix
    M = Nb * Mp_pad
    dt = patches_ref.dtype

    # Bias row + contraction-padding rows.  Rewritten every step (4 rows x M lanes, negligible)
    # so correctness does not depend on a program_id==0 init that a core-partitioned grid
    # would skip on the second TensorCore.
    patches_ref[K:K + 1, :] = jnp.ones((1, M), dtype=dt)
    if K_pad > K + 1:
        patches_ref[K + 1:K_pad, :] = jnp.zeros((K_pad - K - 1, M), dtype=dt)

    # Scatter each (kh, kw) tap of each fused batch element into the scratch at static offsets.
    for b in range(Nb):
        col0 = b * Mp_pad                         # 128-aligned column block for this batch elem
        for kh in range(KH):
            for kw in range(KW):
                t = kh * KW + kw                  # tap index -> row block [t*Cin, (t+1)*Cin)
                s = kh * W + kw                   # static lane offset of this tap in the row buf
                patches_ref[t * Cin:(t + 1) * Cin, col0:col0 + Mp_pad] = \
                    x_ref[b, :, s:s + Mp_pad]

    # Single MXU matmul; bias rides along via the ones row / bias column.
    acc = jnp.dot(w_ref[...], patches_ref[...],
                  preferred_element_type=jnp.float32)        # (Cout_pad, Nb*Mp_pad)

    for b in range(Nb):
        o_ref[b] = acc[:Cout, b * Mp_pad:(b + 1) * Mp_pad].astype(o_ref.dtype)


def example_conv_forward(x_nchw, weight_oihw, bias, *,
                         stride=1, padding=0, dilation=1, groups=1):
    """Forward pass of ExampleConv: Conv2d(...) with nn.Conv2d defaults, NCHW in/out."""
    if (stride, padding, dilation, groups) != (1, 0, 1, 1):
        raise NotImplementedError(
            "ExampleConv only uses nn.Conv2d defaults; stride=1, padding=0, "
            "dilation=1, groups=1 is all this kernel implements.")
    N, Cin, H, W = x_nchw.shape
    Cout, Cin_w, KH, KW = weight_oihw.shape
    assert Cin_w == Cin and bias.shape == (Cout,)
    OH, OW = H - KH + 1, W - KW + 1

    LANE, SUB = 128, 8
    dtype = x_nchw.dtype

    K = KH * KW * Cin                                    # real contraction depth
    K_pad = ((K + 1 + SUB - 1) // SUB) * SUB             # +1 bias row, sublane granule (=40 here)
    Cout_pad = ((Cout + SUB - 1) // SUB) * SUB
    Mp = OH * W                                          # valid output columns per batch element
    Mp_pad = ((Mp + LANE - 1) // LANE) * LANE            # lane-dense padded slab width (=256)

    # Weight matrix (Cout_pad, K_pad): columns ordered (kh, kw, cin); bias at column K.
    # Built in the input dtype so the kernel does not silently upcast patches.
    w2 = jnp.transpose(weight_oihw, (0, 2, 3, 1)).reshape(Cout, K).astype(dtype)
    w_pad = jnp.zeros((Cout_pad, K_pad), dtype)
    w_pad = w_pad.at[:Cout, :K].set(w2)
    w_pad = w_pad.at[:Cout, K].set(bias.astype(dtype))

    # Fuse Nb batch elements per grid step (wider MXU RHS, amortized per-step overhead).
    Nb = min(N, max(1, 512 // Mp_pad))
    N_pad = ((N + Nb - 1) // Nb) * Nb

    # One-time HBM-side padding of x: flatten spatial dims (free contiguous reshape) and
    # right-pad the rows so every tap slice of width Mp_pad is in bounds; round the padded
    # width up to a lane multiple for clean, unmasked DMAs.
    need = (KH - 1) * W + (KW - 1) + Mp_pad              # max tap column index + 1
    Wpad = ((max(need, H * W) + LANE - 1) // LANE) * LANE
    x_flat = jnp.zeros((N_pad, Cin, Wpad), dtype)
    x_flat = x_flat.at[:N, :, :H * W].set(x_nchw.reshape(N, Cin, H * W))

    kernel = functools.partial(
        _conv_im2col_kernel, Cin=Cin, Cout=Cout, W=W, KH=KH, KW=KW,
        Mp_pad=Mp_pad, K=K, K_pad=K_pad, Nb=Nb)

    out_flat = pl.pallas_call(
        kernel,
        out_shape=jax.ShapeDtypeStruct((N_pad, Cout, Mp_pad), dtype),
        grid=(N_pad // Nb,),
        in_specs=[
            pl.BlockSpec((Nb, Cin, Wpad), lambda n: (n, 0, 0)),
            pl.BlockSpec((Cout_pad, K_pad), lambda n: (0, 0)),
        ],
        out_specs=pl.BlockSpec((Nb, Cout, Mp_pad), lambda n: (n, 0, 0)),
        scratch_shapes=[pltpu.VMEM((K_pad, Nb * Mp_pad), dtype)],
        compiler_params=pltpu.CompilerParams(
            dimension_semantics=("parallel",),
            vmem_limit_bytes=32 * 1024 * 1024,
        ),
    )(x_flat, w_pad)

    # Drop batch / lane padding, free reshape back to the full-W grid, slice the right edge.
    return out_flat[:N, :, :Mp].reshape(N, Cout, OH, W)[:, :, :, :OW]


if __name__ == "__main__":
    # Small shapes consistent with the module: N=2, Cin=4, Cout=8, 16x16 input, k=3.
    N, Cin, Cout, H, W, Kk = 2, 4, 8, 16, 16, 3
    key = jax.random.PRNGKey(0)
    k_x, k_b, k_w = jax.random.split(key, 3)

    x = jax.random.normal(k_x, (N, Cin, H, W), dtype=jnp.float32)

    # Module parameters: init_weights() zeroes conv0.weight; bias keeps the default
    # PyTorch uniform(-1/sqrt(fan_in), 1/sqrt(fan_in)) init (deterministic here).
    fan_in = Cin * Kk * Kk
    bound = 1.0 / (fan_in ** 0.5)
    bias = jax.random.uniform(k_b, (Cout,), jnp.float32, -bound, bound)
    weight_zero = jnp.zeros((Cout, Cin, Kk, Kk), jnp.float32)

    OH, OW = H - Kk + 1, W - Kk + 1

    # 1) Module-as-specified path: weight == 0  ->  output == broadcast bias.
    out = jax.block_until_ready(example_conv_forward(x, weight_zero, bias))
    assert out.shape == (N, Cout, OH, OW)
    expected = jnp.broadcast_to(bias.reshape(1, Cout, 1, 1), out.shape)
    assert jnp.allclose(out, expected, atol=1e-5), "zero-weight check failed"

    # 2) Nonzero-weight check: validate the conv arithmetic against XLA's conv.
    weight = 0.1 * jax.random.normal(k_w, (Cout, Cin, Kk, Kk), dtype=jnp.float32)
    out_nz = jax.block_until_ready(example_conv_forward(x, weight, bias))
    ref = jax.lax.conv_general_dilated(
        x, weight, window_strides=(1, 1), padding="VALID",
        dimension_numbers=("NCHW", "OIHW", "NCHW")) + bias.reshape(1, Cout, 1, 1)
    assert jnp.allclose(out_nz, ref, atol=1e-4, rtol=1e-4), "nonzero-weight conv check failed"

    print("KERNEL_OK")
</pallas_src>

<mosaic_0001>
module attributes {stable_mosaic.version = 11 : i64} {
  func.func @_conv_im2col_kernel(%arg0: i32, %arg1: memref<2x4x384xf32, #tpu.memory_space<vmem>>, %arg2: memref<8x40xf32, #tpu.memory_space<vmem>>, %arg3: memref<2x8x256xf32, #tpu.memory_space<vmem>>, %arg4: memref<40x512xf32, #tpu.memory_space<vmem>>) attributes {dimension_semantics = [#tpu.dimension_semantics<parallel>], iteration_bounds = array<i64: 1>, scalar_prefetch = 0 : i64, scratch_operands = 1 : i64, tpu.core_type = #tpu.core_type<tc>, window_params = [{transform_indices = @transform_0, window_bounds = array<i64: 2, 4, 384>}, {pipeline_mode = #tpu.pipeline_mode<synchronous>, transform_indices = @transform_1, window_bounds = array<i64: 8, 40>}, {transform_indices = @transform_2, window_bounds = array<i64: 2, 8, 256>}]} {
    %cst = arith.constant 1.000000e+00 : f32
    %0 = vector.broadcast %cst : f32 to vector<1x512xf32>
    %c36 = arith.constant 36 : index
    %c0 = arith.constant 0 : index
    %1 = vector.load %arg4[%c36, %c0] : memref<40x512xf32, #tpu.memory_space<vmem>>, vector<1x512xf32>
    tpu.vector_store %arg4[%c36, %c0], %0 {strides = array<i32>} : memref<40x512xf32, #tpu.memory_space<vmem>>, vector<1x512xf32>,
    %cst_0 = arith.constant 0.000000e+00 : f32
    %2 = vector.broadcast %cst_0 : f32 to vector<3x512xf32>
    %c37 = arith.constant 37 : index
    %c0_1 = arith.constant 0 : index
    %3 = vector.load %arg4[%c37, %c0_1] : memref<40x512xf32, #tpu.memory_space<vmem>>, vector<3x512xf32>
    tpu.vector_store %arg4[%c37, %c0_1], %2 {strides = array<i32>} : memref<40x512xf32, #tpu.memory_space<vmem>>, vector<3x512xf32>,
    %c0_2 = arith.constant 0 : index
    %c0_3 = arith.constant 0 : index
    %c0_4 = arith.constant 0 : index
    %4 = vector.load %arg1[%c0_2, %c0_3, %c0_4] : memref<2x4x384xf32, #tpu.memory_space<vmem>>, vector<1x4x256xf32>
    %5 = vector.shape_cast %4 : vector<1x4x256xf32> to vector<4x256xf32>
    %c0_5 = arith.constant 0 : index
    %c0_6 = arith.constant 0 : index
    %6 = vector.load %arg4[%c0_5, %c0_6] : memref<40x512xf32, #tpu.memory_space<vmem>>, vector<4x256xf32>
    tpu.vector_store %arg4[%c0_5, %c0_6], %5 {strides = array<i32>} : memref<40x512xf32, #tpu.memory_space<vmem>>, vector<4x256xf32>,
    %c0_7 = arith.constant 0 : index
    %c0_8 = arith.constant 0 : index
    %c1 = arith.constant 1 : index
    %7 = vector.load %arg1[%c0_7, %c0_8, %c1] : memref<2x4x384xf32, #tpu.memory_space<vmem>>, vector<1x4x256xf32>
    %8 = vector.shape_cast %7 : vector<1x4x256xf32> to vector<4x256xf32>
    %c4 = arith.constant 4 : index
    %c0_9 = arith.constant 0 : index
    %9 = vector.load %arg4[%c4, %c0_9] : memref<40x512xf32, #tpu.memory_space<vmem>>, vector<4x256xf32>
    tpu.vector_store %arg4[%c4, %c0_9], %8 {strides = array<i32>} : memref<40x512xf32, #tpu.memory_space<vmem>>, vector<4x256xf32>,
    %c0_10 = arith.constant 0 : index
    %c0_11 = arith.constant 0 : index
    %c2 = arith.constant 2 : index
    %10 = vector.load %arg1[%c0_10, %c0_11, %c2] : memref<2x4x384xf32, #tpu.memory_space<vmem>>, vector<1x4x256xf32>
    %11 = vector.shape_cast %10 : vector<1x4x256xf32> to vector<4x256xf32>
    %c8 = arith.constant 8 : index
    %c0_12 = arith.constant 0 : index
    %12 = vector.load %arg4[%c8, %c0_12] : memref<40x512xf32, #tpu.memory_space<vmem>>, vector<4x256xf32>
    tpu.vector_store %arg4[%c8, %c0_12], %11 {strides = array<i32>} : memref<40x512xf32, #tpu.memory_space<vmem>>, vector<4x256xf32>,
    %c0_13 = arith.constant 0 : index
    %c0_14 = arith.constant 0 : index
    %c16 = arith.constant 16 : index
    %13 = vector.load %arg1[%c0_13, %c0_14, %c16] : memref<2x4x384xf32, #tpu.memory_space<vmem>>, vector<1x4x256xf32>
    %14 = vector.shape_cast %13 : vector<1x4x256xf32> to vector<4x256xf32>
    %c12 = arith.constant 12 : index
    %c0_15 = arith.constant 0 : index
    %15 = vector.load %arg4[%c12, %c0_15] : memref<40x512xf32, #tpu.memory_space<vmem>>, vector<4x256xf32>
    tpu.vector_store %arg4[%c12, %c0_15], %14 {strides = array<i32>} : memref<40x512xf32, #tpu.memory_space<vmem>>, vector<4x256xf32>,
    %c0_16 = arith.constant 0 : index
    %c0_17 = arith.constant 0 : index
    %c17 = arith.constant 17 : index
    %16 = vector.load %arg1[%c0_16, %c0_17, %c17] : memref<2x4x384xf32, #tpu.memory_space<vmem>>, vector<1x4x256xf32>
    %17 = vector.shape_cast %16 : vector<1x4x256xf32> to vector<4x256xf32>
    %c16_18 = arith.constant 16 : index
    %c0_19 = arith.constant 0 : index
    %18 = vector.load %arg4[%c16_18, %c0_19] : memref<40x512xf32, #tpu.memory_space<vmem>>, vector<4x256xf32>
    tpu.vector_store %arg4[%c16_18, %c0_19], %17 {strides = array<i32>} : memref<40x512xf32, #tpu.memory_space<vmem>>, vector<4x256xf32>,
    %c0_20 = arith.constant 0 : index
    %c0_21 = arith.constant 0 : index
    %c18 = arith.constant 18 : index
    %19 = vector.load %arg1[%c0_20, %c0_21, %c18] : memref<2x4x384xf32, #tpu.memory_space<vmem>>, vector<1x4x256xf32>
    %20 = vector.shape_cast %19 : vector<1x4x256xf32> to vector<4x256xf32>
    %c20 = arith.constant 20 : index
    %c0_22 = arith.constant 0 : index
    %21 = vector.load %arg4[%c20, %c0_22] : memref<40x512xf32, #tpu.memory_space<vmem>>, vector<4x256xf32>
    tpu.vector_store %arg4[%c20, %c0_22], %20 {strides = array<i32>} : memref<40x512xf32, #tpu.memory_space<vmem>>, vector<4x256xf32>,
    %c0_23 = arith.constant 0 : index
    %c0_24 = arith.constant 0 : index
    %c32 = arith.constant 32 : index
    %22 = vector.load %arg1[%c0_23, %c0_24, %c32] : memref<2x4x384xf32, #tpu.memory_space<vmem>>, vector<1x4x256xf32>
    %23 = vector.shape_cast %22 : vector<1x4x256xf32> to vector<4x256xf32>
    %c24 = arith.constant 24 : index
    %c0_25 = arith.constant 0 : index
    %24 = vector.load %arg4[%c24, %c0_25] : memref<40x512xf32, #tpu.memory_space<vmem>>, vector<4x256xf32>
    tpu.vector_store %arg4[%c24, %c0_25], %23 {strides = array<i32>} : memref<40x512xf32, #tpu.memory_space<vmem>>, vector<4x256xf32>,
    %c0_26 = arith.constant 0 : index
    %c0_27 = arith.constant 0 : index
    %c33 = arith.constant 33 : index
    %25 = vector.load %arg1[%c0_26, %c0_27, %c33] : memref<2x4x384xf32, #tpu.memory_space<vmem>>, vector<1x4x256xf32>
    %26 = vector.shape_cast %25 : vector<1x4x256xf32> to vector<4x256xf32>
    %c28 = arith.constant 28 : index
    %c0_28 = arith.constant 0 : index
    %27 = vector.load %arg4[%c28, %c0_28] : memref<40x512xf32, #tpu.memory_space<vmem>>, vector<4x256xf32>
    tpu.vector_store %arg4[%c28, %c0_28], %26 {strides = array<i32>} : memref<40x512xf32, #tpu.memory_space<vmem>>, vector<4x256xf32>,
    %c0_29 = arith.constant 0 : index
    %c0_30 = arith.constant 0 : index
    %c34 = arith.constant 34 : index
    %28 = vector.load %arg1[%c0_29, %c0_30, %c34] : memref<2x4x384xf32, #tpu.memory_space<vmem>>, vector<1x4x256xf32>
    %29 = vector.shape_cast %28 : vector<1x4x256xf32> to vector<4x256xf32>
    %c32_31 = arith.constant 32 : index
    %c0_32 = arith.constant 0 : index
    %30 = vector.load %arg4[%c32_31, %c0_32] : memref<40x512xf32, #tpu.memory_space<vmem>>, vector<4x256xf32>
    tpu.vector_store %arg4[%c32_31, %c0_32], %29 {strides = array<i32>} : memref<40x512xf32, #tpu.memory_space<vmem>>, vector<4x256xf32>,
    %c1_33 = arith.constant 1 : index
    %c0_34 = arith.constant 0 : index
    %c0_35 = arith.constant 0 : index
    %31 = vector.load %arg1[%c1_33, %c0_34, %c0_35] : memref<2x4x384xf32, #tpu.memory_space<vmem>>, vector<1x4x256xf32>
    %32 = vector.shape_cast %31 : vector<1x4x256xf32> to vector<4x256xf32>
    %c0_36 = arith.constant 0 : index
    %c256 = arith.constant 256 : index
    %33 = vector.load %arg4[%c0_36, %c256] : memref<40x512xf32, #tpu.memory_space<vmem>>, vector<4x256xf32>
    tpu.vector_store %arg4[%c0_36, %c256], %32 {strides = array<i32>} : memref<40x512xf32, #tpu.memory_space<vmem>>, vector<4x256xf32>,
    %c1_37 = arith.constant 1 : index
    %c0_38 = arith.constant 0 : index
    %c1_39 = arith.constant 1 : index
    %34 = vector.load %arg1[%c1_37, %c0_38, %c1_39] : memref<2x4x384xf32, #tpu.memory_space<vmem>>, vector<1x4x256xf32>
    %35 = vector.shape_cast %34 : vector<1x4x256xf32> to vector<4x256xf32>
    %c4_40 = arith.constant 4 : index
    %c256_41 = arith.constant 256 : index
    %36 = vector.load %arg4[%c4_40, %c256_41] : memref<40x512xf32, #tpu.memory_space<vmem>>, vector<4x256xf32>
    tpu.vector_store %arg4[%c4_40, %c256_41], %35 {strides = array<i32>} : memref<40x512xf32, #tpu.memory_space<vmem>>, vector<4x256xf32>,
    %c1_42 = arith.constant 1 : index
    %c0_43 = arith.constant 0 : index
    %c2_44 = arith.constant 2 : index
    %37 = vector.load %arg1[%c1_42, %c0_43, %c2_44] : memref<2x4x384xf32, #tpu.memory_space<vmem>>, vector<1x4x256xf32>
    %38 = vector.shape_cast %37 : vector<1x4x256xf32> to vector<4x256xf32>
    %c8_45 = arith.constant 8 : index
    %c256_46 = arith.constant 256 : index
    %39 = vector.load %arg4[%c8_45, %c256_46] : memref<40x512xf32, #tpu.memory_space<vmem>>, vector<4x256xf32>
    tpu.vector_store %arg4[%c8_45, %c256_46], %38 {strides = array<i32>} : memref<40x512xf32, #tpu.memory_space<vmem>>, vector<4x256xf32>,
    %c1_47 = arith.constant 1 : index
    %c0_48 = arith.constant 0 : index
    %c16_49 = arith.constant 16 : index
    %40 = vector.load %arg1[%c1_47, %c0_48, %c16_49] : memref<2x4x384xf32, #tpu.memory_space<vmem>>, vector<1x4x256xf32>
    %41 = vector.shape_cast %40 : vector<1x4x256xf32> to vector<4x256xf32>
    %c12_50 = arith.constant 12 : index
    %c256_51 = arith.constant 256 : index
    %42 = vector.load %arg4[%c12_50, %c256_51] : memref<40x512xf32, #tpu.memory_space<vmem>>, vector<4x256xf32>
    tpu.vector_store %arg4[%c12_50, %c256_51], %41 {strides = array<i32>} : memref<40x512xf32, #tpu.memory_space<vmem>>, vector<4x256xf32>,
    %c1_52 = arith.constant 1 : index
    %c0_53 = arith.constant 0 : index
    %c17_54 = arith.constant 17 : index
    %43 = vector.load %arg1[%c1_52, %c0_53, %c17_54] : memref<2x4x384xf32, #tpu.memory_space<vmem>>, vector<1x4x256xf32>
    %44 = vector.shape_cast %43 : vector<1x4x256xf32> to vector<4x256xf32>
    %c16_55 = arith.constant 16 : index
    %c256_56 = arith.constant 256 : index
    %45 = vector.load %arg4[%c16_55, %c256_56] : memref<40x512xf32, #tpu.memory_space<vmem>>, vector<4x256xf32>
    tpu.vector_store %arg4[%c16_55, %c256_56], %44 {strides = array<i32>} : memref<40x512xf32, #tpu.memory_space<vmem>>, vector<4x256xf32>,
    %c1_57 = arith.constant 1 : index
    %c0_58 = arith.constant 0 : index
    %c18_59 = arith.constant 18 : index
    %46 = vector.load %arg1[%c1_57, %c0_58, %c18_59] : memref<2x4x384xf32, #tpu.memory_space<vmem>>, vector<1x4x256xf32>
    %47 = vector.shape_cast %46 : vector<1x4x256xf32> to vector<4x256xf32>
    %c20_60 = arith.constant 20 : index
    %c256_61 = arith.constant 256 : index
    %48 = vector.load %arg4[%c20_60, %c256_61] : memref<40x512xf32, #tpu.memory_space<vmem>>, vector<4x256xf32>
    tpu.vector_store %arg4[%c20_60, %c256_61], %47 {strides = array<i32>} : memref<40x512xf32, #tpu.memory_space<vmem>>, vector<4x256xf32>,
    %c1_62 = arith.constant 1 : index
    %c0_63 = arith.constant 0 : index
    %c32_64 = arith.constant 32 : index
    %49 = vector.load %arg1[%c1_62, %c0_63, %c32_64] : memref<2x4x384xf32, #tpu.memory_space<vmem>>, vector<1x4x256xf32>
    %50 = vector.shape_cast %49 : vector<1x4x256xf32> to vector<4x256xf32>
    %c24_65 = arith.constant 24 : index
    %c256_66 = arith.constant 256 : index
    %51 = vector.load %arg4[%c24_65, %c256_66] : memref<40x512xf32, #tpu.memory_space<vmem>>, vector<4x256xf32>
    tpu.vector_store %arg4[%c24_65, %c256_66], %50 {strides = array<i32>} : memref<40x512xf32, #tpu.memory_space<vmem>>, vector<4x256xf32>,
    %c1_67 = arith.constant 1 : index
    %c0_68 = arith.constant 0 : index
    %c33_69 = arith.constant 33 : index
    %52 = vector.load %arg1[%c1_67, %c0_68, %c33_69] : memref<2x4x384xf32, #tpu.memory_space<vmem>>, vector<1x4x256xf32>
    %53 = vector.shape_cast %52 : vector<1x4x256xf32> to vector<4x256xf32>
    %c28_70 = arith.constant 28 : index
    %c256_71 = arith.constant 256 : index
    %54 = vector.load %arg4[%c28_70, %c256_71] : memref<40x512xf32, #tpu.memory_space<vmem>>, vector<4x256xf32>
    tpu.vector_store %arg4[%c28_70, %c256_71], %53 {strides = array<i32>} : memref<40x512xf32, #tpu.memory_space<vmem>>, vector<4x256xf32>,
    %c1_72 = arith.constant 1 : index
    %c0_73 = arith.constant 0 : index
    %c34_74 = arith.constant 34 : index
    %55 = vector.load %arg1[%c1_72, %c0_73, %c34_74] : memref<2x4x384xf32, #tpu.memory_space<vmem>>, vector<1x4x256xf32>
    %56 = vector.shape_cast %55 : vector<1x4x256xf32> to vector<4x256xf32>
    %c32_75 = arith.constant 32 : index
    %c256_76 = arith.constant 256 : index
    %57 = vector.load %arg4[%c32_75, %c256_76] : memref<40x512xf32, #tpu.memory_space<vmem>>, vector<4x256xf32>
    tpu.vector_store %arg4[%c32_75, %c256_76], %56 {strides = array<i32>} : memref<40x512xf32, #tpu.memory_space<vmem>>, vector<4x256xf32>,
    %c0_77 = arith.constant 0 : index
    %c0_78 = arith.constant 0 : index
    %58 = vector.load %arg2[%c0_77, %c0_78] : memref<8x40xf32, #tpu.memory_space<vmem>>, vector<8x40xf32>
    %c0_79 = arith.constant 0 : index
    %c0_80 = arith.constant 0 : index
    %59 = vector.load %arg4[%c0_79, %c0_80] : memref<40x512xf32, #tpu.memory_space<vmem>>, vector<40x512xf32>
    %cst_81 = arith.constant dense<0.000000e+00> : vector<8x512xf32>
    %60 = tpu.matmul %58, %59, %cst_81 {dimension_numbers = #tpu.dot_dimension_numbers<[1], [0], [0], [1], [0, 0, 1, 1], [], []>} : vector<8x40xf32>, vector<40x512xf32>, vector<8x512xf32> -> vector<8x512xf32>
    %61 = vector.extract_strided_slice %60 {offsets = [0, 0], sizes = [8, 256], strides = [1, 1]} : vector<8x512xf32> to vector<8x256xf32>
    %c0_82 = arith.constant 0 : index
    %c0_83 = arith.constant 0 : index
    %c0_84 = arith.constant 0 : index
    %62 = vector.load %arg3[%c0_82, %c0_83, %c0_84] : memref<2x8x256xf32, #tpu.memory_space<vmem>>, vector<1x8x256xf32>
    %63 = vector.shape_cast %62 : vector<1x8x256xf32> to vector<8x256xf32>
    %64 = vector.shape_cast %61 : vector<8x256xf32> to vector<1x8x256xf32>
    tpu.vector_store %arg3[%c0_82, %c0_83, %c0_84], %64 {strides = array<i32>} : memref<2x8x256xf32, #tpu.memory_space<vmem>>, vector<1x8x256xf32>,
    %65 = vector.extract_strided_slice %60 {offsets = [0, 256], sizes = [8, 256], strides = [1, 1]} : vector<8x512xf32> to vector<8x256xf32>
    %c1_85 = arith.constant 1 : index
    %c0_86 = arith.constant 0 : index
    %c0_87 = arith.constant 0 : index
    %66 = vector.load %arg3[%c1_85, %c0_86, %c0_87] : memref<2x8x256xf32, #tpu.memory_space<vmem>>, vector<1x8x256xf32>
    %67 = vector.shape_cast %66 : vector<1x8x256xf32> to vector<8x256xf32>
    %68 = vector.shape_cast %65 : vector<8x256xf32> to vector<1x8x256xf32>
    tpu.vector_store %arg3[%c1_85, %c0_86, %c0_87], %68 {strides = array<i32>} : memref<2x8x256xf32, #tpu.memory_space<vmem>>, vector<1x8x256xf32>,
    return
  }
  func.func @transform_0(%arg0: i32) -> (i32, i32, i32) {
    %c0_i32 = arith.constant 0 : i32
    %c0_i32_0 = arith.constant 0 : i32
    %c0_i32_1 = arith.constant 0 : i32
    return %arg0, %c0_i32, %c0_i32_0 : i32, i32, i32
  }
  func.func @transform_1(%arg0: i32) -> (i32, i32) {
    %c0_i32 = arith.constant 0 : i32
    %c0_i32_0 = arith.constant 0 : i32
    %c0_i32_1 = arith.constant 0 : i32
    return %c0_i32, %c0_i32_0 : i32, i32
  }
  func.func @transform_2(%arg0: i32) -> (i32, i32, i32) {
    %c0_i32 = arith.constant 0 : i32
    %c0_i32_0 = arith.constant 0 : i32
    %c0_i32_1 = arith.constant 0 : i32
    return %arg0, %c0_i32, %c0_i32_0 : i32, i32, i32
  }
}

</mosaic_0001>

<llo_original>
// kernel: tpu_custom_call.1
$region0: #{tpu_custom_call.1}
  #allocation0 [shape = 'u32[]', space=smem, size = 0x4, offset = 0x4, fixed_abs, tag = 'smem constant byte address 0x4 - core index']
  #allocation1 [shape = 'u32[144,128]{1,0:T(1,128)}', space=vmem, size = 0x12000, scoped, tag = 'internal scratch']
  #allocation2 [shape = 'f32[40,512]{1,0:T(8,128)}', space=vmem, size = 0x14000, scoped, tag = 'scratch operand']
  %s0 = inlined_call_operand.hbm [shape: f32[2,4,384], index: 0, kind: input, shape index: {}]
  %s1 = inlined_call_operand.hbm [shape: f32[8,40], index: 1, kind: input, shape index: {}]
  %s2 = inlined_call_operand.hbm [shape: f32[2,8,256], index: 2, kind: output, shape index: {}]
  %s3 = sld [smem:[#allocation0]]
  $region26: #{tpu_custom_call.1} parent=0
    _
  %s5 = ssub.s32 1, %s3
  %s6 = scalar_select 0, %s5, %s3
  $region1: #{tpu_custom_call.1} parent=0
    #allocation3 [shape = 'u8[12288]{0}', space=vmem, size = 0x3000, scoped, tag = 'input window, operand 0, single buffered']
    #allocation4 [shape = 's32[1]{0}', space=sflag, size = 0x4, scoped, tag = 'scoped memory for tpu_custom_call.1']
    #allocation5 [shape = 's32[1]{0}', space=sflag, size = 0x4, scoped, tag = 'scoped memory for tpu_custom_call.1']
    #allocation6 [shape = 'u8[4096]{0}', space=vmem, size = 0x1000, scoped, tag = 'input window, operand 1, single buffered']
    #allocation7 [shape = 's32[1]{0}', space=sflag, size = 0x4, scoped, tag = 'scoped memory for tpu_custom_call.1']
    #allocation8 [shape = 'u8[16384]{0}', space=vmem, size = 0x4000, scoped, tag = 'output window, operand 0, single buffered']
    %7 = vsyncpa [#allocation4], 0
    %8 = vsyncpa [#allocation7], 0
    %9 = vsyncpa [#allocation5], 0
    // Predicated region
    $region2: #{tpu_custom_call.1} parent=1 // pred_check
      _
    $region3: #{tpu_custom_call.1} parent=1 // pred_check_branch
      %11 = sbr.rel (0) target = $region5
    $region4: #{tpu_custom_call.1} parent=1 // pred_region
      %s13 = ssub.s32 384, 384
      %14 = vsyncadd [#allocation4], %s13
      %s15 = sshll.u32 [#allocation3], 4
      %s16 = int_to_ptr.vmem [resolvable:$true] %s15
      %21 = dma.hbm_to_vmem [thread:$0]  %s0, 384, %s16, [#allocation4], 192, 192, 12
    $region5: #{tpu_custom_call.1} parent=1 // pred_fallthru
      _
    // Predicated region
    $region6: #{tpu_custom_call.1} parent=1 // pred_check
      _
    $region7: #{tpu_custom_call.1} parent=1 // pred_check_branch
      %23 = sbr.rel (0) target = $region9
    $region8: #{tpu_custom_call.1} parent=1 // pred_region
      %s25 = ssub.s32 128, 128
      %26 = vsyncadd [#allocation7], %s25
      %s28 = sshll.u32 [#allocation6], 4
      %s29 = int_to_ptr.vmem [resolvable:$true] %s28
      %31 = dma.hbm_to_vmem [thread:$0]  %s1, 128, %s29, [#allocation7]
    $region9: #{tpu_custom_call.1} parent=1 // pred_fallthru
      _
    // Predicated region
    $region10: #{tpu_custom_call.1} parent=1 // pred_check
      _
    $region11: #{tpu_custom_call.1} parent=1 // pred_check_branch
      %33 = sbr.rel (0) target = $region13
    $region12: #{tpu_custom_call.1} parent=1 // pred_region
      %34 = dma.done [#allocation4], 384
    $region13: #{tpu_custom_call.1} parent=1 // pred_fallthru
      _
    // Predicated region
    $region14: #{tpu_custom_call.1} parent=1 // pred_check
      _
    $region15: #{tpu_custom_call.1} parent=1 // pred_check_branch
      %36 = sbr.rel (0) target = $region17
    $region16: #{tpu_custom_call.1} parent=1 // pred_region
      %37 = dma.done [#allocation7], 128
    $region17: #{tpu_custom_call.1} parent=1 // pred_fallthru
      _
    %v38 = vlaneseq
    %vm39 = vcmp.ge.s32.totalorder %v38, 0
    %vm40 = vcmp.lt.s32.totalorder %v38, 512
    %vm41 = vmand %vm39, %vm40
    %s42 = scalar_lea.vmem [#allocation2], 132
    %43 = vst.msk [vmem:[%s42] ss:$8 sm:$0xf] %vm41, 1.0
    %44 = vst.msk [vmem:[%s42] ss:$8 sm:$0x0] %vm41, 1.0
    %45 = vst [vmem:[#allocation2 + $0x80] sm:$0xe0] 0.0
    %46 = vst [vmem:[#allocation2 + $0x88] sm:$0xe0] 0.0
    %47 = vst [vmem:[#allocation2 + $0x90] sm:$0xe0] 0.0
    %48 = vst [vmem:[#allocation2 + $0x98] sm:$0xe0] 0.0
    %v49 = vld [vmem:[#allocation3] sm:$0xff]
    %v51 = vcombine.high %v49, %v49
    %53 = vst [vmem:[#allocation2] sm:$0xf] %v49
    %54 = vst [vmem:[#allocation2 + $0x8] sm:$0xf] %v51
    %v55 = vld [vmem:[#allocation3] sm:$0xff]
    %v56 = vld [vmem:[#allocation3 + $0x8] sm:$0xf]
    %v59 = vcombine.low %v55, %v55
    %v60 = vcombine.low %v56, %v56
    %61 = vrot.lane.b32.xlu0 %v59, 127
    %v62 = vpop.permute.xlu0 %61
    %63 = vrot.lane.b32.xlu0 %v55, 127
    %v64 = vpop.permute.xlu0 %63
    %65 = vrot.lane.b32.xlu0 %v60, 127
    %v66 = vpop.permute.xlu0 %65
    %vm67 = vcmask 1039360
    %v68 = vsel %vm67, %v62, %v64
    %v69 = vsel %vm67, %v64, %v66
    %72 = vst [vmem:[#allocation2] sm:$0xf0] %v68
    %73 = vst [vmem:[#allocation2 + $0x8] sm:$0xf0] %v69
    %v74 = vld [vmem:[#allocation3] sm:$0xff]
    %v75 = vld [vmem:[#allocation3 + $0x8] sm:$0xf]
    %v78 = vcombine.high %v74, %v74
    %79 = vrot.lane.b32.xlu0 %v74, 126
    %v80 = vpop.permute.xlu0 %79
    %81 = vrot.lane.b32.xlu0 %v78, 126
    %v82 = vpop.permute.xlu0 %81
    %83 = vrot.lane.b32.xlu0 %v75, 126
    %v84 = vpop.permute.xlu0 %83
    %vm85 = vcmask 1031168
    %v86 = vsel %vm85, %v80, %v82
    %v87 = vsel %vm85, %v82, %v84
    %90 = vst [vmem:[#allocation2 + $0x20] sm:$0xf] %v86
    %91 = vst [vmem:[#allocation2 + $0x28] sm:$0xf] %v87
    %v92 = vld [vmem:[#allocation3] sm:$0xff]
    %v93 = vld [vmem:[#allocation3 + $0x8] sm:$0xf]
    %v96 = vcombine.low %v92, %v92
    %v97 = vcombine.low %v93, %v93
    %98 = vrot.lane.b32.xlu0 %v96, 112
    %v99 = vpop.permute.xlu0 %98
    %100 = vrot.lane.b32.xlu0 %v92, 112
    %v101 = vpop.permute.xlu0 %100
    %102 = vrot.lane.b32.xlu0 %v97, 112
    %v103 = vpop.permute.xlu0 %102
    %vm104 = vcmask 916480
    %v105 = vsel %vm104, %v99, %v101
    %v106 = vsel %vm104, %v101, %v103
    %109 = vst [vmem:[#allocation2 + $0x20] sm:$0xf0] %v105
    %110 = vst [vmem:[#allocation2 + $0x28] sm:$0xf0] %v106
    %v111 = vld [vmem:[#allocation3] sm:$0xff]
    %v112 = vld [vmem:[#allocation3 + $0x8] sm:$0xf]
    %v115 = vcombine.high %v111, %v111
    %116 = vrot.lane.b32.xlu0 %v111, 111
    %v117 = vpop.permute.xlu0 %116
    %118 = vrot.lane.b32.xlu0 %v115, 111
    %v119 = vpop.permute.xlu0 %118
    %120 = vrot.lane.b32.xlu0 %v112, 111
    %v121 = vpop.permute.xlu0 %120
    %vm122 = vcmask 908288
    %v123 = vsel %vm122, %v117, %v119
    %v124 = vsel %vm122, %v119, %v121
    %127 = vst [vmem:[#allocation2 + $0x40] sm:$0xf] %v123
    %128 = vst [vmem:[#allocation2 + $0x48] sm:$0xf] %v124
    %v129 = vld [vmem:[#allocation3] sm:$0xff]
    %v130 = vld [vmem:[#allocation3 + $0x8] sm:$0xf]
    %v133 = vcombine.low %v129, %v129
    %v134 = vcombine.low %v130, %v130
    %135 = vrot.lane.b32.xlu0 %v133, 110
    %v136 = vpop.permute.xlu0 %135
    %137 = vrot.lane.b32.xlu0 %v129, 110
    %v138 = vpop.permute.xlu0 %137
    %139 = vrot.lane.b32.xlu0 %v134, 110
    %v140 = vpop.permute.xlu0 %139
    %vm141 = vcmask 900096
    %v142 = vsel %vm141, %v136, %v138
    %v143 = vsel %vm141, %v138, %v140
    %146 = vst [vmem:[#allocation2 + $0x40] sm:$0xf0] %v142
    %147 = vst [vmem:[#allocation2 + $0x48] sm:$0xf0] %v143
    %v148 = vld [vmem:[#allocation3] sm:$0xff]
    %v149 = vld [vmem:[#allocation3 + $0x8] sm:$0xf]
    %v152 = vcombine.high %v148, %v148
    %153 = vrot.lane.b32.xlu0 %v148, 96
    %v154 = vpop.permute.xlu0 %153
    %155 = vrot.lane.b32.xlu0 %v152, 96
    %v156 = vpop.permute.xlu0 %155
    %157 = vrot.lane.b32.xlu0 %v149, 96
    %v158 = vpop.permute.xlu0 %157
    %vm159 = vcmask 785408
    %v160 = vsel %vm159, %v154, %v156
    %v161 = vsel %vm159, %v156, %v158
    %164 = vst [vmem:[#allocation2 + $0x60] sm:$0xf] %v160
    %165 = vst [vmem:[#allocation2 + $0x68] sm:$0xf] %v161
    %v166 = vld [vmem:[#allocation3] sm:$0xff]
    %v167 = vld [vmem:[#allocation3 + $0x8] sm:$0xf]
    %v170 = vcombine.low %v166, %v166
    %v171 = vcombine.low %v167, %v167
    %172 = vrot.lane.b32.xlu0 %v170, 95
    %v173 = vpop.permute.xlu0 %172
    %174 = vrot.lane.b32.xlu0 %v166, 95
    %v175 = vpop.permute.xlu0 %174
    %176 = vrot.lane.b32.xlu0 %v171, 95
    %v177 = vpop.permute.xlu0 %176
    %vm178 = vcmask 777216
    %v179 = vsel %vm178, %v173, %v175
    %v180 = vsel %vm178, %v175, %v177
    %183 = vst [vmem:[#allocation2 + $0x60] sm:$0xf0] %v179
    %184 = vst [vmem:[#allocation2 + $0x68] sm:$0xf0] %v180
    %v185 = vld [vmem:[#allocation3] sm:$0xff]
    %v186 = vld [vmem:[#allocation3 + $0x8] sm:$0xf]
    %v189 = vcombine.high %v185, %v185
    %190 = vrot.lane.b32.xlu0 %v185, 94
    %v191 = vpop.permute.xlu0 %190
    %192 = vrot.lane.b32.xlu0 %v189, 94
    %v193 = vpop.permute.xlu0 %192
    %194 = vrot.lane.b32.xlu0 %v186, 94
    %v195 = vpop.permute.xlu0 %194
    %vm196 = vcmask 769024
    %v197 = vsel %vm196, %v191, %v193
    %v198 = vsel %vm196, %v193, %v195
    %201 = vst [vmem:[#allocation2 + $0x80] sm:$0xf] %v197
    %202 = vst [vmem:[#allocation2 + $0x88] sm:$0xf] %v198
    %s203 = scalar_lea.vmem [#allocation3], 12
    %v204 = vld [vmem:[%s203] sm:$0xff]
    %v206 = vcombine.high %v204, %v204
    %208 = vst [vmem:[#allocation2 + $0x10] sm:$0xf] %v204
    %209 = vst [vmem:[#allocation2 + $0x18] sm:$0xf] %v206
    %v210 = vld [vmem:[%s203] sm:$0xff]
    %v211 = vld [vmem:[%s203 + $0x8] sm:$0xf]
    %v214 = vcombine.low %v210, %v210
    %v215 = vcombine.low %v211, %v211
    %216 = vrot.lane.b32.xlu0 %v214, 127
    %v217 = vpop.permute.xlu0 %216
    %218 = vrot.lane.b32.xlu0 %v210, 127
    %v219 = vpop.permute.xlu0 %218
    %220 = vrot.lane.b32.xlu0 %v215, 127
    %v221 = vpop.permute.xlu0 %220
    %v222 = vsel %vm67, %v217, %v219
    %v223 = vsel %vm67, %v219, %v221
    %226 = vst [vmem:[#allocation2 + $0x10] sm:$0xf0] %v222
    %227 = vst [vmem:[#allocation2 + $0x18] sm:$0xf0] %v223
    %v228 = vld [vmem:[%s203] sm:$0xff]
    %v229 = vld [vmem:[%s203 + $0x8] sm:$0xf]
    %v232 = vcombine.high %v228, %v228
    %233 = vrot.lane.b32.xlu0 %v228, 126
    %v234 = vpop.permute.xlu0 %233
    %235 = vrot.lane.b32.xlu0 %v232, 126
    %v236 = vpop.permute.xlu0 %235
    %237 = vrot.lane.b32.xlu0 %v229, 126
    %v238 = vpop.permute.xlu0 %237
    %v239 = vsel %vm85, %v234, %v236
    %v240 = vsel %vm85, %v236, %v238
    %243 = vst [vmem:[#allocation2 + $0x30] sm:$0xf] %v239
    %244 = vst [vmem:[#allocation2 + $0x38] sm:$0xf] %v240
    %v245 = vld [vmem:[%s203] sm:$0xff]
    %v246 = vld [vmem:[%s203 + $0x8] sm:$0xf]
    %v249 = vcombine.low %v245, %v245
    %v250 = vcombine.low %v246, %v246
    %251 = vrot.lane.b32.xlu0 %v249, 112
    %v252 = vpop.permute.xlu0 %251
    %253 = vrot.lane.b32.xlu0 %v245, 112
    %v254 = vpop.permute.xlu0 %253
    %255 = vrot.lane.b32.xlu0 %v250, 112
    %v256 = vpop.permute.xlu0 %255
    %v257 = vsel %vm104, %v252, %v254
    %v258 = vsel %vm104, %v254, %v256
    %261 = vst [vmem:[#allocation2 + $0x30] sm:$0xf0] %v257
    %262 = vst [vmem:[#allocation2 + $0x38] sm:$0xf0] %v258
    %v263 = vld [vmem:[%s203] sm:$0xff]
    %v264 = vld [vmem:[%s203 + $0x8] sm:$0xf]
    %v267 = vcombine.high %v263, %v263
    %268 = vrot.lane.b32.xlu0 %v263, 111
    %v269 = vpop.permute.xlu0 %268
    %270 = vrot.lane.b32.xlu0 %v267, 111
    %v271 = vpop.permute.xlu0 %270
    %272 = vrot.lane.b32.xlu0 %v264, 111
    %v273 = vpop.permute.xlu0 %272
    %v274 = vsel %vm122, %v269, %v271
    %v275 = vsel %vm122, %v271, %v273
    %278 = vst [vmem:[#allocation2 + $0x50] sm:$0xf] %v274
    %279 = vst [vmem:[#allocation2 + $0x58] sm:$0xf] %v275
    %v280 = vld [vmem:[%s203] sm:$0xff]
    %v281 = vld [vmem:[%s203 + $0x8] sm:$0xf]
    %v284 = vcombine.low %v280, %v280
    %v285 = vcombine.low %v281, %v281
    %286 = vrot.lane.b32.xlu0 %v284, 110
    %v287 = vpop.permute.xlu0 %286
    %288 = vrot.lane.b32.xlu0 %v280, 110
    %v289 = vpop.permute.xlu0 %288
    %290 = vrot.lane.b32.xlu0 %v285, 110
    %v291 = vpop.permute.xlu0 %290
    %v292 = vsel %vm141, %v287, %v289
    %v293 = vsel %vm141, %v289, %v291
    %296 = vst [vmem:[#allocation2 + $0x50] sm:$0xf0] %v292
    %297 = vst [vmem:[#allocation2 + $0x58] sm:$0xf0] %v293
    %v298 = vld [vmem:[%s203] sm:$0xff]
    %v299 = vld [vmem:[%s203 + $0x8] sm:$0xf]
    %v302 = vcombine.high %v298, %v298
    %303 = vrot.lane.b32.xlu0 %v298, 96
    %v304 = vpop.permute.xlu0 %303
    %305 = vrot.lane.b32.xlu0 %v302, 96
    %v306 = vpop.permute.xlu0 %305
    %307 = vrot.lane.b32.xlu0 %v299, 96
    %v308 = vpop.permute.xlu0 %307
    %v309 = vsel %vm159, %v304, %v306
    %v310 = vsel %vm159, %v306, %v308
    %313 = vst [vmem:[#allocation2 + $0x70] sm:$0xf] %v309
    %314 = vst [vmem:[#allocation2 + $0x78] sm:$0xf] %v310
    %v315 = vld [vmem:[%s203] sm:$0xff]
    %v316 = vld [vmem:[%s203 + $0x8] sm:$0xf]
    %v319 = vcombine.low %v315, %v315
    %v320 = vcombine.low %v316, %v316
    %321 = vrot.lane.b32.xlu0 %v319, 95
    %v322 = vpop.permute.xlu0 %321
    %323 = vrot.lane.b32.xlu0 %v315, 95
    %v324 = vpop.permute.xlu0 %323
    %325 = vrot.lane.b32.xlu0 %v320, 95
    %v326 = vpop.permute.xlu0 %325
    %v327 = vsel %vm178, %v322, %v324
    %v328 = vsel %vm178, %v324, %v326
    %331 = vst [vmem:[#allocation2 + $0x70] sm:$0xf0] %v327
    %332 = vst [vmem:[#allocation2 + $0x78] sm:$0xf0] %v328
    %v333 = vld [vmem:[%s203] sm:$0xff]
    %v334 = vld [vmem:[%s203 + $0x8] sm:$0xf]
    %v337 = vcombine.high %v333, %v333
    %338 = vrot.lane.b32.xlu0 %v333, 94
    %v339 = vpop.permute.xlu0 %338
    %340 = vrot.lane.b32.xlu0 %v337, 94
    %v341 = vpop.permute.xlu0 %340
    %342 = vrot.lane.b32.xlu0 %v334, 94
    %v343 = vpop.permute.xlu0 %342
    %v344 = vsel %vm196, %v339, %v341
    %v345 = vsel %vm196, %v341, %v343
    %348 = vst [vmem:[#allocation2 + $0x90] sm:$0xf] %v344
    %349 = vst [vmem:[#allocation2 + $0x98] sm:$0xf] %v345
    %v350 = vld [vmem:[#allocation6] sm:$0xff]
    %v351 = vld [vmem:[#allocation2] sm:$0xff]
    %v352 = vld [vmem:[#allocation2 + $0x8] sm:$0xff]
    %v353 = vld [vmem:[#allocation2 + $0x10] sm:$0xff]
    %v354 = vld [vmem:[#allocation2 + $0x18] sm:$0xff]
    %v355 = vld [vmem:[#allocation2 + $0x20] sm:$0xff]
    %v356 = vld [vmem:[#allocation2 + $0x28] sm:$0xff]
    %v357 = vld [vmem:[#allocation2 + $0x30] sm:$0xff]
    %v358 = vld [vmem:[#allocation2 + $0x38] sm:$0xff]
    %v359 = vld [vmem:[#allocation2 + $0x40] sm:$0xff]
    %v360 = vld [vmem:[#allocation2 + $0x48] sm:$0xff]
    %v361 = vld [vmem:[#allocation2 + $0x50] sm:$0xff]
    %v362 = vld [vmem:[#allocation2 + $0x58] sm:$0xff]
    %v363 = vld [vmem:[#allocation2 + $0x60] sm:$0xff]
    %v364 = vld [vmem:[#allocation2 + $0x68] sm:$0xff]
    %v365 = vld [vmem:[#allocation2 + $0x70] sm:$0xff]
    %v366 = vld [vmem:[#allocation2 + $0x78] sm:$0xff]
    %v367 = vld [vmem:[#allocation2 + $0x80] sm:$0xff]
    %v368 = vld [vmem:[#allocation2 + $0x88] sm:$0xff]
    %v369 = vld [vmem:[#allocation2 + $0x90] sm:$0xff]
    %v370 = vld [vmem:[#allocation2 + $0x98] sm:$0xff]
    %vm371 = vcmask 326656
    %v373 = vsel %vm371, %v350, 0
    %375 = vmatprep.subr.mxu0 0.0
    %376 = vmatpush1.msra.mxu0 0.0
    %377 = vmatprep.subr.mxu0 0.0
    %378 = vmatpush1.msra.mxu0 0.0
    %379 = vmatprep.subr.mxu0 0.0
    %380 = vmatpush1.msra.mxu0 0.0
    %381 = vmatprep.subr.mxu0 0.0
    %382 = vmatpush1.msra.mxu0 0.0
    %383 = vmatprep.subr.mxu0 0.0
    %384 = vmatpush1.msra.mxu0 0.0
    %385 = vmatprep.subr.mxu0 0.0
    %386 = vmatpush1.msra.mxu0 0.0
    %387 = vmatprep.subr.mxu0 0.0
    %388 = vmatpush1.msra.mxu0 0.0
    %389 = vmatprep.subr.mxu0 0.0
    %390 = vmatpush1.msra.mxu0 0.0
    %391 = vmatprep.subr.mxu0 0.0
    %392 = vmatpush1.msra.mxu0 0.0
    %393 = vmatprep.subr.mxu0 0.0
    %394 = vmatpush1.msra.mxu0 0.0
    %395 = vmatprep.subr.mxu0 0.0
    %396 = vmatpush1.msra.mxu0 0.0
    %397 = vmatprep.subr.mxu0 %v368
    %398 = vmatpush1.msra.mxu0 %v367
    %399 = vmatprep.subr.mxu0 %v364
    %400 = vmatpush1.msra.mxu0 %v363
    %401 = vmatprep.subr.mxu0 %v360
    %402 = vmatpush1.msra.mxu0 %v359
    %403 = vmatprep.subr.mxu0 %v356
    %404 = vmatpush1.msra.mxu0 %v355
    %405 = vmatprep.subr.mxu0 %v352
    %406 = vmatpush1.msra.mxu0 %v351
    %407 = vmatprep.subr.mxu0 0.0
    %408 = vmatpush2.msra.mxu0 0.0
    %409 = vmatprep.subr.mxu0 0.0
    %410 = vmatpush2.msra.mxu0 0.0
    %411 = vmatprep.subr.mxu0 0.0
    %412 = vmatpush2.msra.mxu0 0.0
    %413 = vmatprep.subr.mxu0 0.0
    %414 = vmatpush2.msra.mxu0 0.0
    %415 = vmatprep.subr.mxu0 0.0
    %416 = vmatpush2.msra.mxu0 0.0
    %417 = vmatprep.subr.mxu0 0.0
    %418 = vmatpush2.msra.mxu0 0.0
    %419 = vmatprep.subr.mxu0 0.0
    %420 = vmatpush2.msra.mxu0 0.0
    %421 = vmatprep.subr.mxu0 0.0
    %422 = vmatpush2.msra.mxu0 0.0
    %423 = vmatprep.subr.mxu0 0.0
    %424 = vmatpush2.msra.mxu0 0.0
    %425 = vmatprep.subr.mxu0 0.0
    %426 = vmatpush2.msra.mxu0 0.0
    %427 = vmatprep.subr.mxu0 0.0
    %428 = vmatpush2.msra.mxu0 0.0
    %429 = vmatprep.subr.mxu0 0.0
    %430 = vmatpush2.msra.mxu0 0.0
    %431 = vmatprep.subr.mxu0 0.0
    %432 = vmatpush2.msra.mxu0 0.0
    %433 = vmatprep.subr.mxu0 0.0
    %434 = vmatpush2.msra.mxu0 0.0
    %435 = vmatprep.subr.mxu0 0.0
    %436 = vmatpush2.msra.mxu0 0.0
    %437 = vmatprep.subr.mxu0 0.0
    %438 = vmatpush2.msra.mxu0 0.0
    %439 = vmatprep.mubr.f32.mxu0 0.0
    %440 = vmatmul.mubr.f32.gmra.mxu0 %v373
    %v441 = vpop.f32.mrf.mxu0
    %v442 = vadd.f32 0.0, %v441
    %v443 = vpop.f32.mrf.mxu0
    %v444 = vadd.f32 0.0, %v443
    %445 = vdwg.mxu0
    %446 = vmatprep.subr.mxu0 0.0
    %447 = vmatpush1.msra.mxu0 0.0
    %448 = vmatprep.subr.mxu0 0.0
    %449 = vmatpush1.msra.mxu0 0.0
    %450 = vmatprep.subr.mxu0 0.0
    %451 = vmatpush1.msra.mxu0 0.0
    %452 = vmatprep.subr.mxu0 0.0
    %453 = vmatpush1.msra.mxu0 0.0
    %454 = vmatprep.subr.mxu0 0.0
    %455 = vmatpush1.msra.mxu0 0.0
    %456 = vmatprep.subr.mxu0 0.0
    %457 = vmatpush1.msra.mxu0 0.0
    %458 = vmatprep.subr.mxu0 0.0
    %459 = vmatpush1.msra.mxu0 0.0
    %460 = vmatprep.subr.mxu0 0.0
    %461 = vmatpush1.msra.mxu0 0.0
    %462 = vmatprep.subr.mxu0 0.0
    %463 = vmatpush1.msra.mxu0 0.0
    %464 = vmatprep.subr.mxu0 0.0
    %465 = vmatpush1.msra.mxu0 0.0
    %466 = vmatprep.subr.mxu0 0.0
    %467 = vmatpush1.msra.mxu0 0.0
    %468 = vmatprep.subr.mxu0 %v370
    %469 = vmatpush1.msra.mxu0 %v369
    %470 = vmatprep.subr.mxu0 %v366
    %471 = vmatpush1.msra.mxu0 %v365
    %472 = vmatprep.subr.mxu0 %v362
    %473 = vmatpush1.msra.mxu0 %v361
    %474 = vmatprep.subr.mxu0 %v358
    %475 = vmatpush1.msra.mxu0 %v357
    %476 = vmatprep.subr.mxu0 %v354
    %477 = vmatpush1.msra.mxu0 %v353
    %478 = vmatprep.subr.mxu0 0.0
    %479 = vmatpush2.msra.mxu0 0.0
    %480 = vmatprep.subr.mxu0 0.0
    %481 = vmatpush2.msra.mxu0 0.0
    %482 = vmatprep.subr.mxu0 0.0
    %483 = vmatpush2.msra.mxu0 0.0
    %484 = vmatprep.subr.mxu0 0.0
    %485 = vmatpush2.msra.mxu0 0.0
    %486 = vmatprep.subr.mxu0 0.0
    %487 = vmatpush2.msra.mxu0 0.0
    %488 = vmatprep.subr.mxu0 0.0
    %489 = vmatpush2.msra.mxu0 0.0
    %490 = vmatprep.subr.mxu0 0.0
    %491 = vmatpush2.msra.mxu0 0.0
    %492 = vmatprep.subr.mxu0 0.0
    %493 = vmatpush2.msra.mxu0 0.0
    %494 = vmatprep.subr.mxu0 0.0
    %495 = vmatpush2.msra.mxu0 0.0
    %496 = vmatprep.subr.mxu0 0.0
    %497 = vmatpush2.msra.mxu0 0.0
    %498 = vmatprep.subr.mxu0 0.0
    %499 = vmatpush2.msra.mxu0 0.0
    %500 = vmatprep.subr.mxu0 0.0
    %501 = vmatpush2.msra.mxu0 0.0
    %502 = vmatprep.subr.mxu0 0.0
    %503 = vmatpush2.msra.mxu0 0.0
    %504 = vmatprep.subr.mxu0 0.0
    %505 = vmatpush2.msra.mxu0 0.0
    %506 = vmatprep.subr.mxu0 0.0
    %507 = vmatpush2.msra.mxu0 0.0
    %508 = vmatprep.subr.mxu0 0.0
    %509 = vmatpush2.msra.mxu0 0.0
    %510 = vmatprep.mubr.f32.mxu0 0.0
    %511 = vmatmul.mubr.f32.gmra.mxu0 %v373
    %v512 = vpop.f32.mrf.mxu0
    %v513 = vadd.f32 0.0, %v512
    %v514 = vpop.f32.mrf.mxu0
    %v515 = vadd.f32 0.0, %v514
    %516 = vdwg.mxu0
    %517 = vst [vmem:[#allocation8] sm:$0xff] %v442
    %518 = vst [vmem:[#allocation8 + $0x8] sm:$0xff] %v444
    %s519 = scalar_lea.vmem [#allocation8], 16
    %520 = vst [vmem:[%s519] sm:$0xff] %v513
    %521 = vst [vmem:[%s519 + $0x8] sm:$0xff] %v515
    // Predicated region
    $region18: #{tpu_custom_call.1} parent=1 // pred_check
      _
    $region19: #{tpu_custom_call.1} parent=1 // pred_check_branch
      %523 = sbr.rel (0) target = $region21
    $region20: #{tpu_custom_call.1} parent=1 // pred_region
      %s525 = ssub.s32 512, 512
      %526 = vsyncadd [#allocation5], %s525
      %s527 = sshll.u32 [#allocation8], 4
      %s528 = int_to_ptr.vmem [resolvable:$true] %s527
      %533 = dma.vmem_to_hbm [thread:$0]  %s528, 512, %s2, [#allocation5], 256, 256, 16
    $region21: #{tpu_custom_call.1} parent=1 // pred_fallthru
      _
    // Predicated region
    $region22: #{tpu_custom_call.1} parent=1 // pred_check
      _
    $region23: #{tpu_custom_call.1} parent=1 // pred_check_branch
      %535 = sbr.rel (0) target = $region25
    $region24: #{tpu_custom_call.1} parent=1 // pred_region
      %536 = dma.done [#allocation5], 512
    $region25: #{tpu_custom_call.1} parent=1 // pred_fallthru
      _
    %537 = vsyncpa [#allocation4], 1
    %538 = vsyncpa [#allocation7], 1
    %539 = vsyncpa [#allocation5], 1

</llo_original>
